<compile_context>
chip_gen: v7x
topology: tpu7x:2x2x1
jax: 0.10.0
libtpu: 0.0.40
codegen_flags: <defaults>
</compile_context>

<pallas_src>
import jax
import jax.numpy as jnp
from jax.experimental import pallas as pl
from jax.experimental.pallas import tpu as pltpu


def encoder_kernel(xp_ref, w_ref, b_ref, o_ref):
    # xp_ref: (Bt, L+2, D) bf16   w_ref: (3*D, Hp) bf16
    # b_ref : (1, Hp)      f32    o_ref: (Bt, Hp)  f32
    Bt, Lp2, D = xp_ref.shape
    L = Lp2 - 2
    Hp = w_ref.shape[-1]

    xp = xp_ref[...]                                            # (Bt, L+2, D)

    # Windowed operand from static slices of the pre-padded block (no zero rows,
    # no axis=1 concatenates): xw[b, t] = [x[b,t-1], x[b,t], x[b,t+1]] -> (Bt, L, 3D).
    xw = jnp.concatenate(
        [xp[:, 0:L, :], xp[:, 1:L + 1, :], xp[:, 2:L + 2, :]], axis=-1)

    # Single fused MXU matmul over all three taps: bf16 x bf16 -> f32 accumulation.
    y = jnp.dot(xw.reshape(Bt * L, 3 * D), w_ref[...],
                preferred_element_type=jnp.float32)             # (Bt*L, Hp)

    # Max-pool over the sequence first; bias + ReLU hoisted past the (monotone) max.
    m = jnp.max(y.reshape(Bt, L, Hp), axis=1)                   # (Bt, Hp)
    o_ref[...] = jnp.maximum(m + b_ref[...], 0.0)               # lane-dense store


def _pick_bt(B, L, D, Hp, vmem_budget=12 * 1024 * 1024):
    """Batch rows per grid step: fill the MXU M-dim, stay inside a VMEM budget,
    keep >=2 parallel steps when the batch allows it (v7x megacore), and keep
    multi-step tiles sublane-aligned (multiple of 8)."""
    def rup(v, m):
        return ((v + m - 1) // m) * m

    # Per-batch-row VMEM cost of one grid step (lane-padded, double-buffered I/O
    # blocks + bf16 windowed operand + f32 matmul result).
    per_row = (2 * (L + 2) * rup(D, 128) * 2      # input block, bf16, x2 buffers
               + L * rup(3 * D, 128) * 2          # xw operand (bf16)
               + L * Hp * 4                       # matmul result (f32)
               + 2 * Hp * 4)                      # output block, f32, x2 buffers
    bt_cap = max(1, vmem_budget // per_row)

    bt = max(1, 1024 // max(L, 1))                # target M = bt*L ~ 1024 rows
    bt = min(bt, bt_cap)

    if bt >= B:
        # One step would cover the whole batch; split in two only if each half
        # still has a healthy MXU M-dim (>=2 parallel steps -> both v7x cores).
        bt2 = pl.cdiv(pl.cdiv(B, 2), 8) * 8
        if B >= 2 and bt2 < B and bt2 * L >= 512:
            return bt2
        return B                                  # single block == full batch dim
    return max(8, (bt // 8) * 8)                  # sublane-aligned multi-step tile


def encoder_forward(x_nlc, w_conv, bias, *, bt=None):
    """x_nlc: (B, L, D) f32; w_conv: (H, D, 3) f32 (PyTorch Conv1d layout);
    bias: (H,) f32  ->  (B, H) f32."""
    B, L, D = x_nlc.shape
    H = w_conv.shape[0]
    Hp = ((H + 127) // 128) * 128                 # lane-dense output width

    # Stack the conv taps into one (3D, Hp) matmul weight: rows [k*D:(k+1)*D] = tap k,
    # matching the [x[t-1], x[t], x[t+1]] window ordering.  Zero-pad H -> Hp so the
    # output block is lane-dense; cast weights to bf16 for the MXU.
    w_stk = jnp.transpose(w_conv, (2, 1, 0)).reshape(3 * D, H)
    w_stk = jnp.pad(w_stk, ((0, 0), (0, Hp - H))).astype(jnp.bfloat16)
    b_pad = jnp.pad(bias, (0, Hp - H)).reshape(1, Hp).astype(jnp.float32)

    if bt is None:
        bt = _pick_bt(B, L, D, Hp)
    B_pad = pl.cdiv(B, bt) * bt

    # Pre-pad once in the wrapper: zero batch rows up to B_pad (partial blocks never
    # see garbage) and one zero timestep on each side (the conv's padding=1); cast to
    # bf16 for the MXU (accumulation stays f32 in-kernel).  Pad+cast fuse in XLA.
    xp = jnp.pad(x_nlc, ((0, B_pad - B), (1, 1), (0, 0))).astype(jnp.bfloat16)

    grid = (B_pad // bt,)
    out = pl.pallas_call(
        encoder_kernel,
        out_shape=jax.ShapeDtypeStruct((B_pad, Hp), jnp.float32),
        grid_spec=pltpu.PrefetchScalarGridSpec(
            num_scalar_prefetch=0,
            grid=grid,
            in_specs=[
                pl.BlockSpec((bt, L + 2, D), lambda i: (i, 0, 0)),
                pl.BlockSpec((3 * D, Hp), lambda i: (0, 0)),
                pl.BlockSpec((1, Hp), lambda i: (0, 0)),
            ],
            out_specs=pl.BlockSpec((bt, Hp), lambda i: (i, 0)),
        ),
        compiler_params=pltpu.CompilerParams(
            dimension_semantics=("parallel",),
            vmem_limit_bytes=32 * 1024 * 1024,
        ),
    )(xp, w_stk, b_pad)

    return out[:B, :H]


def encoder_reference(x_nlc, w_conv, bias):
    """Pure-JAX reference mirroring the PyTorch forward (conv -> relu -> maxpool)."""
    L = x_nlc.shape[1]
    xpad = jnp.pad(x_nlc, ((0, 0), (1, 1), (0, 0)))
    windows = jnp.stack([xpad[:, k:k + L, :] for k in range(3)], axis=-1)  # (B,L,D,3)
    y = jnp.einsum('bldk,hdk->blh', windows, w_conv,
                   precision=jax.lax.Precision.HIGHEST) + bias             # (B,L,H)
    return jnp.max(jnp.maximum(y, 0.0), axis=1)                            # (B,H)


if __name__ == "__main__":
    # Small shapes consistent with the module: Encoder(max_length=16,
    # word_embedding_dim=32, hidden_size=32), batch=2.
    B, L, D, H = 2, 16, 32, 32

    key = jax.random.PRNGKey(0)
    kx, kw, kb = jax.random.split(key, 3)

    x = jax.random.normal(kx, (B, L, D), dtype=jnp.float32)
    w_conv = jax.random.normal(kw, (H, D, 3), dtype=jnp.float32) * 0.05  # Conv1d (H,D,3)
    bias = jax.random.normal(kb, (H,), dtype=jnp.float32) * 0.05

    out = jax.block_until_ready(encoder_forward(x, w_conv, bias))
    assert out.shape == (B, H)

    # Tight check: reference computed from the same bf16-rounded operands in f32.
    x_r = x.astype(jnp.bfloat16).astype(jnp.float32)
    w_r = w_conv.astype(jnp.bfloat16).astype(jnp.float32)
    ref_bf16 = encoder_reference(x_r, w_r, bias)
    assert jnp.allclose(out, ref_bf16, atol=1e-3, rtol=1e-3), "mismatch vs bf16 reference"

    # Loose check: full-f32 PyTorch-equivalent math (bf16 MXU operands -> small drift).
    ref_f32 = encoder_reference(x, w_conv, bias)
    assert jnp.allclose(out, ref_f32, atol=5e-2, rtol=5e-2), "mismatch vs f32 reference"

    print("KERNEL_OK")
</pallas_src>

<mosaic_0001>
module attributes {stable_mosaic.version = 11 : i64} {
  func.func @encoder_kernel(%arg0: i32, %arg1: memref<2x18x32xbf16, #tpu.memory_space<vmem>>, %arg2: memref<96x128xbf16, #tpu.memory_space<vmem>>, %arg3: memref<1x128xf32, #tpu.memory_space<vmem>>, %arg4: memref<2x128xf32, #tpu.memory_space<vmem>>) attributes {dimension_semantics = [#tpu.dimension_semantics<parallel>], iteration_bounds = array<i64: 1>, scalar_prefetch = 0 : i64, scratch_operands = 0 : i64, tpu.core_type = #tpu.core_type<tc>, window_params = [{transform_indices = @transform_0, window_bounds = array<i64: 2, 18, 32>}, {pipeline_mode = #tpu.pipeline_mode<synchronous>, transform_indices = @transform_1, window_bounds = array<i64: 96, 128>}, {pipeline_mode = #tpu.pipeline_mode<synchronous>, transform_indices = @transform_2, window_bounds = array<i64: 1, 128>}, {transform_indices = @transform_3, window_bounds = array<i64: 2, 128>}]} {
    %c0 = arith.constant 0 : index
    %c0_0 = arith.constant 0 : index
    %c0_1 = arith.constant 0 : index
    %0 = vector.load %arg1[%c0, %c0_0, %c0_1] : memref<2x18x32xbf16, #tpu.memory_space<vmem>>, vector<2x18x32xbf16>
    %1 = vector.extract_strided_slice %0 {offsets = [0, 0, 0], sizes = [2, 16, 32], strides = [1, 1, 1]} : vector<2x18x32xbf16> to vector<2x16x32xbf16>
    %2 = vector.extract_strided_slice %0 {offsets = [0, 1, 0], sizes = [2, 16, 32], strides = [1, 1, 1]} : vector<2x18x32xbf16> to vector<2x16x32xbf16>
    %3 = vector.extract_strided_slice %0 {offsets = [0, 2, 0], sizes = [2, 16, 32], strides = [1, 1, 1]} : vector<2x18x32xbf16> to vector<2x16x32xbf16>
    %4 = tpu.concatenate %1, %2, %3 in 2 : vector<2x16x32xbf16>, vector<2x16x32xbf16>, vector<2x16x32xbf16> -> vector<2x16x96xbf16>
    %5 = vector.shape_cast %4 : vector<2x16x96xbf16> to vector<32x96xbf16>
    %c0_2 = arith.constant 0 : index
    %c0_3 = arith.constant 0 : index
    %6 = vector.load %arg2[%c0_2, %c0_3] : memref<96x128xbf16, #tpu.memory_space<vmem>>, vector<96x128xbf16>
    %cst = arith.constant dense<0.000000e+00> : vector<32x128xf32>
    %7 = tpu.matmul %5, %6, %cst {dimension_numbers = #tpu.dot_dimension_numbers<[1], [0], [0], [1], [0, 0, 1, 1], [], []>} : vector<32x96xbf16>, vector<96x128xbf16>, vector<32x128xf32> -> vector<32x128xf32>
    %8 = vector.shape_cast %7 : vector<32x128xf32> to vector<2x16x128xf32>
    %cst_4 = arith.constant dense<0xFF800000> : vector<2x128xf32>
    %9 = vector.multi_reduction <maximumf>, %8, %cst_4 [1] : vector<2x16x128xf32> to vector<2x128xf32>
    %c0_5 = arith.constant 0 : index
    %c0_6 = arith.constant 0 : index
    %10 = vector.load %arg3[%c0_5, %c0_6] : memref<1x128xf32, #tpu.memory_space<vmem>>, vector<1x128xf32>
    %11 = vector.broadcast %10 : vector<1x128xf32> to vector<2x128xf32>
    %12 = arith.addf %9, %11 : vector<2x128xf32>
    %cst_7 = arith.constant 0.000000e+00 : f32
    %13 = vector.broadcast %cst_7 : f32 to vector<2x128xf32>
    %14 = arith.maximumf %12, %13 : vector<2x128xf32>
    %c0_8 = arith.constant 0 : index
    %c0_9 = arith.constant 0 : index
    %15 = vector.load %arg4[%c0_8, %c0_9] : memref<2x128xf32, #tpu.memory_space<vmem>>, vector<2x128xf32>
    tpu.vector_store %arg4[%c0_8, %c0_9], %14 {strides = array<i32>} : memref<2x128xf32, #tpu.memory_space<vmem>>, vector<2x128xf32>,
    return
  }
  func.func @transform_0(%arg0: i32) -> (i32, i32, i32) {
    %c0_i32 = arith.constant 0 : i32
    %c0_i32_0 = arith.constant 0 : i32
    %c0_i32_1 = arith.constant 0 : i32
    return %arg0, %c0_i32, %c0_i32_0 : i32, i32, i32
  }
  func.func @transform_1(%arg0: i32) -> (i32, i32) {
    %c0_i32 = arith.constant 0 : i32
    %c0_i32_0 = arith.constant 0 : i32
    %c0_i32_1 = arith.constant 0 : i32
    return %c0_i32, %c0_i32_0 : i32, i32
  }
  func.func @transform_2(%arg0: i32) -> (i32, i32) {
    %c0_i32 = arith.constant 0 : i32
    %c0_i32_0 = arith.constant 0 : i32
    %c0_i32_1 = arith.constant 0 : i32
    return %c0_i32, %c0_i32_0 : i32, i32
  }
  func.func @transform_3(%arg0: i32) -> (i32, i32) {
    %c0_i32 = arith.constant 0 : i32
    %c0_i32_0 = arith.constant 0 : i32
    return %arg0, %c0_i32 : i32, i32
  }
}

</mosaic_0001>

<llo_original>
// kernel: tpu_custom_call.1
$region0: #{tpu_custom_call.1}
  #allocation0 [shape = 'u32[]', space=smem, size = 0x4, offset = 0x4, fixed_abs, tag = 'smem constant byte address 0x4 - core index']
  #allocation1 [shape = 'u32[144,128]{1,0:T(1,128)}', space=vmem, size = 0x12000, scoped, tag = 'internal scratch']
  %s0 = inlined_call_operand.vmem [shape: bf16[2,18,32], index: 0, kind: input, shape index: {}]
  %s1 = inlined_call_operand.hbm [shape: bf16[96,128], index: 1, kind: input, shape index: {}]
  %s2 = inlined_call_operand.vmem [shape: f32[1,128], index: 2, kind: input, shape index: {}]
  %s3 = inlined_call_operand.hbm [shape: f32[2,128], index: 3, kind: output, shape index: {}]
  %s4 = sld [smem:[#allocation0]]
  $region26: #{tpu_custom_call.1} parent=0
    _
  %s6 = ssub.s32 1, %s4
  %s7 = scalar_select 0, %s6, %s4
  $region1: #{tpu_custom_call.1} parent=0
    #allocation2 [shape = 'u8[24576]{0}', space=vmem, size = 0x6000, scoped, tag = 'input window, operand 1, single buffered']
    #allocation3 [shape = 's32[1]{0}', space=sflag, size = 0x4, scoped, tag = 'scoped memory for tpu_custom_call.1']
    #allocation4 [shape = 's32[1]{0}', space=sflag, size = 0x4, scoped, tag = 'scoped memory for tpu_custom_call.1']
    #allocation5 [shape = 'u8[1024]{0}', space=vmem, size = 0x400, scoped, tag = 'output window, operand 0, single buffered']
    %8 = vsyncpa [#allocation3], 0
    %9 = vsyncpa [#allocation4], 0
    // Predicated region
    $region2: #{tpu_custom_call.1} parent=1 // pred_check
      _
    $region3: #{tpu_custom_call.1} parent=1 // pred_check_branch
      %11 = sbr.rel (0) target = $region5
    $region4: #{tpu_custom_call.1} parent=1 // pred_region
      _
    $region5: #{tpu_custom_call.1} parent=1 // pred_fallthru
      _
    // Predicated region
    $region6: #{tpu_custom_call.1} parent=1 // pred_check
      _
    $region7: #{tpu_custom_call.1} parent=1 // pred_check_branch
      %13 = sbr.rel (0) target = $region9
    $region8: #{tpu_custom_call.1} parent=1 // pred_region
      %s15 = ssub.s32 768, 768
      %16 = vsyncadd [#allocation3], %s15
      %s17 = sshll.u32 [#allocation2], 4
      %s18 = int_to_ptr.vmem [resolvable:$true] %s17
      %23 = dma.hbm_to_vmem [thread:$0]  %s1, 768, %s18, [#allocation3], 64, 64, 4
    $region9: #{tpu_custom_call.1} parent=1 // pred_fallthru
      _
    // Predicated region
    $region10: #{tpu_custom_call.1} parent=1 // pred_check
      _
    $region11: #{tpu_custom_call.1} parent=1 // pred_check_branch
      %25 = sbr.rel (0) target = $region13
    $region12: #{tpu_custom_call.1} parent=1 // pred_region
      _
    $region13: #{tpu_custom_call.1} parent=1 // pred_fallthru
      _
    // Predicated region
    $region14: #{tpu_custom_call.1} parent=1 // pred_check
      _
    $region15: #{tpu_custom_call.1} parent=1 // pred_check_branch
      %27 = sbr.rel (0) target = $region17
    $region16: #{tpu_custom_call.1} parent=1 // pred_region
      %28 = dma.done [#allocation3], 768
    $region17: #{tpu_custom_call.1} parent=1 // pred_fallthru
      _
    %v30 = vld [vmem:[%s0] sm:$0xf]
    %v31 = vld [vmem:[%s0 + $0x4] sm:$0xf]
    %v32 = vld [vmem:[%s0 + $0x8] sm:$0x1]
    %v33 = vld [vmem:[%s0 + $0xc] sm:$0xf]
    %v34 = vld [vmem:[%s0 + $0x10] sm:$0xf]
    %v35 = vld [vmem:[%s0 + $0x14] sm:$0x1]
    %v40 = vunpack.c.l.b16 %v30
    %v41 = vunpack.c.l.b16 %v31
    %v42 = vunpack.c.l.b16 %v33
    %v43 = vunpack.c.l.b16 %v34
    %v44 = vpack.c.b16 %v41, %v40
    %v45 = vpack.c.b16 %v43, %v42
    %v48 = vunpack.c.l.b16 %v32
    %v49 = vunpack.c.l.b16 %v35
    %v50 = vpack.c.b16 %v48, %v48
    %v51 = vpack.c.b16 %v49, %v49
    %vm52 = vsmask.f32 7424
    %v54 = vshrl.u32 %v44, 16
    %v56 = vshll.u32 %v44, 16
    %v58 = vrot.slane %v56, 1
    %v59 = vor.u32 %v54, %v58
    %v61 = vshll.u32 %v50, 16
    %v63 = vrot.slane %v61, 1
    %v64 = vsel %vm52, %v59, %v63
    %v66 = vshrl.u32 %v45, 16
    %v68 = vshll.u32 %v45, 16
    %v70 = vrot.slane %v68, 1
    %v71 = vor.u32 %v66, %v70
    %v73 = vshll.u32 %v51, 16
    %v75 = vrot.slane %v73, 1
    %v76 = vsel %vm52, %v71, %v75
    %77 = vrot.lane.b32.xlu0 %v64, 32
    %v78 = vpop.permute.xlu0 %77
    %79 = vrot.lane.b32.xlu0 %v76, 32
    %v80 = vpop.permute.xlu0 %79
    %vm81 = vcmask 1046528
    %v82 = vrot.slane %v44, 1
    %v83 = vrot.slane %v50, 1
    %v84 = vsel %vm81, %v82, %v83
    %v85 = vrot.slane %v45, 1
    %v86 = vrot.slane %v51, 1
    %v87 = vsel %vm81, %v85, %v86
    %88 = vrot.lane.b32.xlu0 %v84, 64
    %v89 = vpop.permute.xlu0 %88
    %90 = vrot.lane.b32.xlu0 %v87, 64
    %v91 = vpop.permute.xlu0 %90
    %vm92 = vcmask 261120
    %v94 = vsel %vm92, %v44, %v78
    %v96 = vsel %vm92, %v45, %v80
    %vm97 = vcmask 523264
    %v99 = vsel %vm97, %v94, %v89
    %v101 = vsel %vm97, %v96, %v91
    %v102 = vld [vmem:[#allocation2] sm:$0xf]
    %v103 = vld [vmem:[#allocation2 + $0x4] sm:$0xf]
    %v104 = vld [vmem:[#allocation2 + $0x8] sm:$0xf]
    %v105 = vld [vmem:[#allocation2 + $0xc] sm:$0xf]
    %v106 = vld [vmem:[#allocation2 + $0x10] sm:$0xf]
    %v107 = vld [vmem:[#allocation2 + $0x14] sm:$0xf]
    %v108 = vld [vmem:[#allocation2 + $0x18] sm:$0xf]
    %v109 = vld [vmem:[#allocation2 + $0x1c] sm:$0xf]
    %v110 = vld [vmem:[#allocation2 + $0x20] sm:$0xf]
    %v111 = vld [vmem:[#allocation2 + $0x24] sm:$0xf]
    %v112 = vld [vmem:[#allocation2 + $0x28] sm:$0xf]
    %v113 = vld [vmem:[#allocation2 + $0x2c] sm:$0xf]
    %v126 = vunpack.c.l.b16 %v102
    %v127 = vunpack.c.l.b16 %v103
    %v128 = vunpack.c.l.b16 %v104
    %v129 = vunpack.c.l.b16 %v105
    %v130 = vunpack.c.l.b16 %v106
    %v131 = vunpack.c.l.b16 %v107
    %v132 = vunpack.c.l.b16 %v108
    %v133 = vunpack.c.l.b16 %v109
    %v134 = vunpack.c.l.b16 %v110
    %v135 = vunpack.c.l.b16 %v111
    %v136 = vunpack.c.l.b16 %v112
    %v137 = vunpack.c.l.b16 %v113
    %v138 = vpack.c.b16 %v127, %v126
    %v139 = vpack.c.b16 %v129, %v128
    %v140 = vpack.c.b16 %v131, %v130
    %v141 = vpack.c.b16 %v133, %v132
    %v142 = vpack.c.b16 %v135, %v134
    %v143 = vpack.c.b16 %v137, %v136
    %vm150 = vcmask 785408
    %v151 = vsel %vm150, %v99, 0
    %v153 = vsel %vm150, %v101, 0
    %155 = vmatprep.subr.bf16.mxu0 0
    %156 = vmatpush1.bf16.msra.mxu0 %v138
    %157 = vmatprep.subr.bf16.mxu0 0
    %158 = vmatpush1.bf16.msra.mxu0 %v139
    %159 = vmatprep.subr.bf16.mxu0 0
    %160 = vmatpush1.bf16.msra.mxu0 %v140
    %161 = vmatprep.subr.bf16.mxu0 0
    %162 = vmatpush1.bf16.msra.mxu0 %v141
    %163 = vmatprep.subr.bf16.mxu0 0
    %164 = vmatpush1.bf16.msra.mxu0 %v142
    %165 = vmatprep.subr.bf16.mxu0 0
    %166 = vmatpush1.bf16.msra.mxu0 %v143
    %167 = vmatprep.subr.bf16.mxu0 0
    %168 = vmatpush1.bf16.msra.mxu0 0
    %169 = vmatprep.subr.bf16.mxu0 0
    %170 = vmatpush1.bf16.msra.mxu0 0
    %171 = vmatprep.subr.bf16.mxu0 0
    %172 = vmatpush1.bf16.msra.mxu0 0
    %173 = vmatprep.subr.bf16.mxu0 0
    %174 = vmatpush1.bf16.msra.mxu0 0
    %175 = vmatprep.subr.bf16.mxu0 0
    %176 = vmatpush1.bf16.msra.mxu0 0
    %177 = vmatprep.subr.bf16.mxu0 0
    %178 = vmatpush1.bf16.msra.mxu0 0
    %179 = vmatprep.subr.bf16.mxu0 0
    %180 = vmatpush1.bf16.msra.mxu0 0
    %181 = vmatprep.subr.bf16.mxu0 0
    %182 = vmatpush1.bf16.msra.mxu0 0
    %183 = vmatprep.subr.bf16.mxu0 0
    %184 = vmatpush1.bf16.msra.mxu0 0
    %185 = vmatprep.subr.bf16.mxu0 0
    %186 = vmatpush1.bf16.msra.mxu0 0
    %187 = vmatprep.mubr.bf16.mxu0 0
    %188 = vmatmul.mubr.bf16.gmra.mrb[0].mxu0 %v151
    %v189 = vpop.f32.mrb[0].mxu0
    %v190 = vadd.f32 0.0, %v189
    %v191 = vpop.f32.mrb[0].mxu0
    %v192 = vpop.f32.mrb[0].mxu0
    %v193 = vadd.f32 0.0, %v192
    %v194 = vpop.f32.mrb[0].mxu0
    %195 = vmatprep.mubr.bf16.mxu0 0
    %196 = vmatmul.mubr.bf16.gmra.mrb[0].mxu0 %v153
    %v197 = vpop.f32.mrb[0].mxu0
    %v198 = vadd.f32 0.0, %v197
    %v199 = vpop.f32.mrb[0].mxu0
    %v200 = vpop.f32.mrb[0].mxu0
    %v201 = vadd.f32 0.0, %v200
    %v202 = vpop.f32.mrb[0].mxu0
    %203 = vdwg.mxu0
    %v204 = vmax.f32 %v190, %v193
    %v205 = vrot.slane %v204, 4
    %v206 = vmax.f32 %v204, %v205
    %v207 = vrot.slane %v206, 2
    %v208 = vmax.f32 %v206, %v207
    %v209 = vrot.slane %v208, 1
    %v210 = vmax.f32 %v208, %v209
    %v211 = vmax.f32 %v198, %v201
    %v212 = vrot.slane %v211, 4
    %v213 = vmax.f32 %v211, %v212
    %v214 = vrot.slane %v213, 2
    %v215 = vmax.f32 %v213, %v214
    %v216 = vrot.slane %v215, 1
    %v217 = vmax.f32 %v215, %v216
    %v218 = vld [vmem:[%s2] sm:$0x1]
    %v220 = vlaneseq
    %v221 = vshrl.u32 %v220, 7
    %v222 = vsub.s32 0, %v221
    %v223 = vrot.slane %v218, %v222
    %v225 = vadd.f32 %v210, %v223
    %v226 = vadd.f32 %v217, %v223
    %v227 = vmax.f32 %v225, 0.0
    %v228 = vmax.f32 %v226, 0.0
    %v231 = vrot.slane %v228, 7
    %vm232 = vcmask 1041409
    %v233 = vsel %vm232, %v231, %v227
    %235 = vst [vmem:[#allocation5] sm:$0x3] %v233
    // Predicated region
    $region18: #{tpu_custom_call.1} parent=1 // pred_check
      _
    $region19: #{tpu_custom_call.1} parent=1 // pred_check_branch
      %237 = sbr.rel (0) target = $region21
    $region20: #{tpu_custom_call.1} parent=1 // pred_region
      %s239 = ssub.s32 32, 32
      %240 = vsyncadd [#allocation4], %s239
      %s242 = sshll.u32 [#allocation5], 4
      %s243 = int_to_ptr.vmem [resolvable:$true] %s242
      %245 = dma.vmem_to_hbm [thread:$0]  %s243, 32, %s3, [#allocation4]
    $region21: #{tpu_custom_call.1} parent=1 // pred_fallthru
      _
    // Predicated region
    $region22: #{tpu_custom_call.1} parent=1 // pred_check
      _
    $region23: #{tpu_custom_call.1} parent=1 // pred_check_branch
      %247 = sbr.rel (0) target = $region25
    $region24: #{tpu_custom_call.1} parent=1 // pred_region
      %248 = dma.done [#allocation4], 32
    $region25: #{tpu_custom_call.1} parent=1 // pred_fallthru
      _
    %249 = vsyncpa [#allocation3], 1
    %250 = vsyncpa [#allocation4], 1

</llo_original>
